<compile_context>
chip_gen: v5e
topology: v5e:2x2
jax: 0.10.0
libtpu: 0.0.40
codegen_flags: <defaults>
</compile_context>

<pallas_src>
import functools

import numpy as np
import jax
import jax.numpy as jnp
from jax.experimental import pallas as pl
from jax.experimental.pallas import tpu as pltpu

# ---------------- problem sizes (small, consistent with the module) -------------
B = 2          # batch
H = 8          # spatial height
W = 8          # spatial width
N = H * W      # sequence length (= H*W tokens)
C = 16         # in_features
HID = 4 * C    # hidden_features (default: in_features * 4)

_INV_SQRT2 = np.float32(1.0 / np.sqrt(2.0))


def _round_up(v, m):
    return (v + m - 1) // m * m


def mixffn_kernel(x_ref, w1_ref, b1_ref, dww_ref, dwb_ref, w2_ref, b2_ref, o_ref,
                  *, height, width):
    n_tok = height * width
    lanes = w1_ref.shape[1]                      # B * HID (packed hidden width)

    # ---- dense1 on the MXU: bf16 operands, f32 accumulation ---------------------
    h = jnp.dot(x_ref[...], w1_ref[...],
                preferred_element_type=jnp.float32) + b1_ref[...]   # (N, lanes) f32

    # ---- depthwise 3x3 conv, padding=1, stride=1 ((batch, channel) on lanes) ----
    # One zero-row-padded buffer; row(-y) taps are tile-aligned leading-dim slices,
    # column(-x) taps are XLU rolls of the same buffer with one border mask each.
    zpad = jnp.zeros((width, lanes), jnp.float32)
    hp = jnp.concatenate([zpad, h, zpad], axis=0)        # ((H+2)*W, lanes)
    rows = (height + 2) * width

    # column-in-row index, used to zero the wrapped border column after the rolls
    col = jax.lax.broadcasted_iota(
        jnp.int32, (height + 2, width, lanes), 1).reshape(rows, lanes)
    shifted = {
        # tap[n] = hp[n - 1]  ->  h[y, x-1]; zero where x == 0
        -1: jnp.where(col == 0, 0.0, pltpu.roll(hp, shift=1, axis=0)),
        0: hp,
        # tap[n] = hp[n + 1]  ->  h[y, x+1]; zero where x == W-1
        1: jnp.where(col == width - 1, 0.0, pltpu.roll(hp, shift=rows - 1, axis=0)),
    }

    dww = dww_ref[...]                                    # (9, lanes), loaded once
    conv = None
    for ky in range(3):                                   # 9 static taps, unrolled
        for kx in range(3):
            dy, dx = ky - 1, kx - 1
            start = (1 + dy) * width                      # 0/W/2W: sublane-aligned
            tap = shifted[dx][start:start + n_tok]        # (N, lanes) aligned slice
            term = tap * dww[ky * 3 + kx]
            conv = term if conv is None else conv + term
    conv = conv + dwb_ref[...]                            # per-channel bias (1, lanes)

    # ---- exact GELU (erf form, matches torch.nn.GELU()), f32 --------------------
    g = 0.5 * conv * (1.0 + jax.lax.erf(conv * _INV_SQRT2))

    # ---- dense2 on the MXU: bf16 operands, f32 accumulation ---------------------
    # w2 is block-diagonal and zero-padded to 128 output lanes -> full unmasked vst.
    out = jnp.dot(g.astype(jnp.bfloat16), w2_ref[...],
                  preferred_element_type=jnp.float32) + b2_ref[...]

    # dropout: identity in eval/inference mode (no RNG applied)
    o_ref[...] = out.astype(o_ref.dtype)


def pack_mixffn_params(w1, b1, dw_w, dw_b, w2, b2, batch):
    """One-time parameter packing (hoisted out of the per-call path).

    Lane-packs the batch by building batch-block-diagonal dense weights so the kernel
    sees activations as (N, batch*HID) full-width vregs.  MXU weights are stored bf16;
    bias / depthwise parameters stay f32 (conv + GELU math is f32 in the kernel).
    """
    c_in, hid = w1.shape
    k_lanes = _round_up(batch * c_in, 128)
    out_lanes = _round_up(batch * c_in, 128)
    eye_b = jnp.eye(batch, dtype=jnp.float32)
    w1_p = jnp.pad(jnp.kron(eye_b, w1),
                   ((0, k_lanes - batch * c_in), (0, 0))).astype(jnp.bfloat16)
    b1_p = jnp.tile(b1, (1, batch))                                   # (1, B*HID)
    dww_p = jnp.tile(dw_w, (1, batch))                                # (9, B*HID)
    dwb_p = jnp.tile(dw_b, (1, batch))                                # (1, B*HID)
    w2_p = jnp.pad(jnp.kron(eye_b, w2),
                   ((0, 0), (0, out_lanes - batch * c_in))).astype(jnp.bfloat16)
    b2_p = jnp.pad(jnp.tile(b2, (1, batch)),
                   ((0, 0), (0, out_lanes - batch * c_in)))           # (1, 128)
    return w1_p, b1_p, dww_p, dwb_p, w2_p, b2_p


@functools.partial(jax.jit, static_argnames=("height", "width"))
def segformer_mix_ffn(x, height, width, w1_p, b1_p, dww_p, dwb_p, w2_p, b2_p):
    """x: (B, N, C) float32, N == height*width; *_p from pack_mixffn_params (bf16/f32)."""
    batch, n_tok, c_in = x.shape
    k_lanes = w1_p.shape[0]
    out_lanes = w2_p.shape[1]

    # Per-call input packing: tokens on sublanes, (batch, channel) on lanes,
    # zero-padded to 128 lanes so the dense1 LHS load is lane-dense; cast to bf16
    # for the MXU (accumulation stays f32 inside the kernel).
    x_packed = jnp.transpose(x, (1, 0, 2)).reshape(n_tok, batch * c_in)
    x_packed = jnp.pad(x_packed,
                       ((0, 0), (0, k_lanes - batch * c_in))).astype(jnp.bfloat16)

    kernel = functools.partial(mixffn_kernel, height=height, width=width)
    vmem_spec = pl.BlockSpec(memory_space=pltpu.MemorySpace.VMEM)
    out_full = pl.pallas_call(
        kernel,
        out_shape=jax.ShapeDtypeStruct((n_tok, out_lanes), jnp.float32),
        in_specs=[vmem_spec] * 7,          # whole arrays resident in VMEM, no grid
        out_specs=vmem_spec,
    )(x_packed, w1_p, b1_p, dww_p, dwb_p, w2_p, b2_p)

    # Unpack: drop the zero lane padding and restore (B, N, C).
    out = out_full[:, :batch * c_in].reshape(n_tok, batch, c_in)
    return jnp.transpose(out, (1, 0, 2))


def reference(x, w1, b1, dw_w, dw_b, w2, b2):
    """Pure-JAX f32 reference (same math, NHWC depthwise conv via pad+shift)."""
    h = x @ w1 + b1                                                # (B, N, HID)
    h4 = h.reshape(B, H, W, HID)
    hp = jnp.pad(h4, ((0, 0), (1, 1), (1, 1), (0, 0)))
    conv = jnp.zeros((B, H, W, HID), jnp.float32)
    for t in range(9):
        dy, dx = t // 3, t % 3
        conv = conv + hp[:, dy:dy + H, dx:dx + W, :] * dw_w[t]
    conv = conv + dw_b
    a = conv.reshape(B, N, HID)
    g = 0.5 * a * (1.0 + jax.lax.erf(a * _INV_SQRT2))
    return g @ w2 + b2


if __name__ == "__main__":
    key = jax.random.PRNGKey(0)
    k_x, k_w1, k_b1, k_dw, k_db, k_w2, k_b2 = jax.random.split(key, 7)

    # Deterministic synthetic parameters.
    # Torch convention vs. ours:
    #   dense1.weight (HID, C)      -> w1 = weight.T               : (C, HID)
    #   dense1.bias   (HID,)        -> b1                          : (1, HID)
    #   dwconv.weight (HID, 1, 3,3) -> dw_w[t, c] = w[c,0,t//3,t%3]: (9, HID)
    #   dwconv.bias   (HID,)        -> dw_b                        : (1, HID)
    #   dense2.weight (C, HID)      -> w2 = weight.T               : (HID, C)
    #   dense2.bias   (C,)          -> b2                          : (1, C)
    x    = jax.random.normal(k_x,  (B, N, C),  dtype=jnp.float32)
    w1   = jax.random.normal(k_w1, (C, HID),   dtype=jnp.float32) * 0.1
    b1   = jax.random.normal(k_b1, (1, HID),   dtype=jnp.float32) * 0.1
    dw_w = jax.random.normal(k_dw, (9, HID),   dtype=jnp.float32) * 0.1
    dw_b = jax.random.normal(k_db, (1, HID),   dtype=jnp.float32) * 0.1
    w2   = jax.random.normal(k_w2, (HID, C),   dtype=jnp.float32) * 0.1
    b2   = jax.random.normal(k_b2, (1, C),     dtype=jnp.float32) * 0.1

    # One-time packing ("module init"); NOT part of the per-call forward path.
    packed = jax.block_until_ready(
        pack_mixffn_params(w1, b1, dw_w, dw_b, w2, b2, B))

    out = segformer_mix_ffn(x, H, W, *packed)
    out = jax.block_until_ready(out)

    ref = reference(x, w1, b1, dw_w, dw_b, w2, b2)
    assert out.shape == (B, N, C)
    # bf16 MXU operands vs. the fp32 reference introduce ~0.2-0.5% relative error;
    # tolerance widened accordingly (conv/GELU/accumulation remain f32).
    np.testing.assert_allclose(np.asarray(out), np.asarray(ref),
                               rtol=1e-2, atol=1e-2)
    print("KERNEL_OK")
</pallas_src>

<mosaic_0001>
module attributes {stable_mosaic.version = 11 : i64} {
  func.func @mixffn_kernel(%arg0: memref<64x128xbf16, #tpu.memory_space<vmem>>, %arg1: memref<128x128xbf16, #tpu.memory_space<vmem>>, %arg2: memref<1x128xf32, #tpu.memory_space<vmem>>, %arg3: memref<9x128xf32, #tpu.memory_space<vmem>>, %arg4: memref<1x128xf32, #tpu.memory_space<vmem>>, %arg5: memref<128x128xbf16, #tpu.memory_space<vmem>>, %arg6: memref<1x128xf32, #tpu.memory_space<vmem>>, %arg7: memref<64x128xf32, #tpu.memory_space<vmem>>) attributes {dimension_semantics = [], scalar_prefetch = 0 : i64, scratch_operands = 0 : i64, tpu.core_type = #tpu.core_type<tc>} {
    %c0 = arith.constant 0 : index
    %c0_0 = arith.constant 0 : index
    %0 = vector.load %arg0[%c0, %c0_0] : memref<64x128xbf16, #tpu.memory_space<vmem>>, vector<64x128xbf16>
    %c0_1 = arith.constant 0 : index
    %c0_2 = arith.constant 0 : index
    %1 = vector.load %arg1[%c0_1, %c0_2] : memref<128x128xbf16, #tpu.memory_space<vmem>>, vector<128x128xbf16>
    %cst = arith.constant dense<0.000000e+00> : vector<64x128xf32>
    %2 = tpu.matmul %0, %1, %cst {dimension_numbers = #tpu.dot_dimension_numbers<[1], [0], [0], [1], [0, 0, 1, 1], [], []>} : vector<64x128xbf16>, vector<128x128xbf16>, vector<64x128xf32> -> vector<64x128xf32>
    %c0_3 = arith.constant 0 : index
    %c0_4 = arith.constant 0 : index
    %3 = vector.load %arg2[%c0_3, %c0_4] : memref<1x128xf32, #tpu.memory_space<vmem>>, vector<1x128xf32>
    %4 = vector.broadcast %3 : vector<1x128xf32> to vector<64x128xf32>
    %5 = arith.addf %2, %4 : vector<64x128xf32>
    %cst_5 = arith.constant 0.000000e+00 : f32
    %6 = vector.broadcast %cst_5 : f32 to vector<8x128xf32>
    %7 = tpu.concatenate %6, %5, %6 in 0 : vector<8x128xf32>, vector<64x128xf32>, vector<8x128xf32> -> vector<80x128xf32>
    %8 = tpu.iota {dimensions = array<i32: 1>} : vector<10x8x128xi32>
    %9 = vector.shape_cast %8 : vector<10x8x128xi32> to vector<80x128xi32>
    %c0_i32 = arith.constant 0 : i32
    %10 = vector.broadcast %c0_i32 : i32 to vector<80x128xi32>
    %11 = arith.cmpi eq, %9, %10 : vector<80x128xi32>
    %c1_i32 = arith.constant 1 : i32
    %12 = tpu.dynamic_rotate %7 by %c1_i32 dim 0 : vector<80x128xf32>, i32 -> vector<80x128xf32>
    %cst_6 = arith.constant 0.000000e+00 : f32
    %13 = vector.broadcast %cst_6 : f32 to vector<80x128xf32>
    %14 = arith.select %11, %13, %12 : vector<80x128xi1>, vector<80x128xf32>
    %c7_i32 = arith.constant 7 : i32
    %15 = vector.broadcast %c7_i32 : i32 to vector<80x128xi32>
    %16 = arith.cmpi eq, %9, %15 : vector<80x128xi32>
    %c79_i32 = arith.constant 79 : i32
    %17 = tpu.dynamic_rotate %7 by %c79_i32 dim 0 : vector<80x128xf32>, i32 -> vector<80x128xf32>
    %cst_7 = arith.constant 0.000000e+00 : f32
    %18 = vector.broadcast %cst_7 : f32 to vector<80x128xf32>
    %19 = arith.select %16, %18, %17 : vector<80x128xi1>, vector<80x128xf32>
    %c0_8 = arith.constant 0 : index
    %c0_9 = arith.constant 0 : index
    %20 = vector.load %arg3[%c0_8, %c0_9] : memref<9x128xf32, #tpu.memory_space<vmem>>, vector<9x128xf32>
    %21 = vector.extract_strided_slice %14 {offsets = [0, 0], sizes = [64, 128], strides = [1, 1]} : vector<80x128xf32> to vector<64x128xf32>
    %22 = vector.extract_strided_slice %20 {offsets = [0, 0], sizes = [1, 128], strides = [1, 1]} : vector<9x128xf32> to vector<1x128xf32>
    %23 = vector.shape_cast %22 : vector<1x128xf32> to vector<128xf32>
    %24 = vector.shape_cast %23 : vector<128xf32> to vector<1x128xf32>
    %25 = vector.broadcast %24 : vector<1x128xf32> to vector<64x128xf32>
    %26 = arith.mulf %21, %25 : vector<64x128xf32>
    %27 = vector.extract_strided_slice %7 {offsets = [0, 0], sizes = [64, 128], strides = [1, 1]} : vector<80x128xf32> to vector<64x128xf32>
    %28 = vector.extract_strided_slice %20 {offsets = [1, 0], sizes = [1, 128], strides = [1, 1]} : vector<9x128xf32> to vector<1x128xf32>
    %29 = vector.shape_cast %28 : vector<1x128xf32> to vector<128xf32>
    %30 = vector.shape_cast %29 : vector<128xf32> to vector<1x128xf32>
    %31 = vector.broadcast %30 : vector<1x128xf32> to vector<64x128xf32>
    %32 = arith.mulf %27, %31 : vector<64x128xf32>
    %33 = arith.addf %26, %32 : vector<64x128xf32>
    %34 = vector.extract_strided_slice %19 {offsets = [0, 0], sizes = [64, 128], strides = [1, 1]} : vector<80x128xf32> to vector<64x128xf32>
    %35 = vector.extract_strided_slice %20 {offsets = [2, 0], sizes = [1, 128], strides = [1, 1]} : vector<9x128xf32> to vector<1x128xf32>
    %36 = vector.shape_cast %35 : vector<1x128xf32> to vector<128xf32>
    %37 = vector.shape_cast %36 : vector<128xf32> to vector<1x128xf32>
    %38 = vector.broadcast %37 : vector<1x128xf32> to vector<64x128xf32>
    %39 = arith.mulf %34, %38 : vector<64x128xf32>
    %40 = arith.addf %33, %39 : vector<64x128xf32>
    %41 = vector.extract_strided_slice %14 {offsets = [8, 0], sizes = [64, 128], strides = [1, 1]} : vector<80x128xf32> to vector<64x128xf32>
    %42 = vector.extract_strided_slice %20 {offsets = [3, 0], sizes = [1, 128], strides = [1, 1]} : vector<9x128xf32> to vector<1x128xf32>
    %43 = vector.shape_cast %42 : vector<1x128xf32> to vector<128xf32>
    %44 = vector.shape_cast %43 : vector<128xf32> to vector<1x128xf32>
    %45 = vector.broadcast %44 : vector<1x128xf32> to vector<64x128xf32>
    %46 = arith.mulf %41, %45 : vector<64x128xf32>
    %47 = arith.addf %40, %46 : vector<64x128xf32>
    %48 = vector.extract_strided_slice %7 {offsets = [8, 0], sizes = [64, 128], strides = [1, 1]} : vector<80x128xf32> to vector<64x128xf32>
    %49 = vector.extract_strided_slice %20 {offsets = [4, 0], sizes = [1, 128], strides = [1, 1]} : vector<9x128xf32> to vector<1x128xf32>
    %50 = vector.shape_cast %49 : vector<1x128xf32> to vector<128xf32>
    %51 = vector.shape_cast %50 : vector<128xf32> to vector<1x128xf32>
    %52 = vector.broadcast %51 : vector<1x128xf32> to vector<64x128xf32>
    %53 = arith.mulf %48, %52 : vector<64x128xf32>
    %54 = arith.addf %47, %53 : vector<64x128xf32>
    %55 = vector.extract_strided_slice %19 {offsets = [8, 0], sizes = [64, 128], strides = [1, 1]} : vector<80x128xf32> to vector<64x128xf32>
    %56 = vector.extract_strided_slice %20 {offsets = [5, 0], sizes = [1, 128], strides = [1, 1]} : vector<9x128xf32> to vector<1x128xf32>
    %57 = vector.shape_cast %56 : vector<1x128xf32> to vector<128xf32>
    %58 = vector.shape_cast %57 : vector<128xf32> to vector<1x128xf32>
    %59 = vector.broadcast %58 : vector<1x128xf32> to vector<64x128xf32>
    %60 = arith.mulf %55, %59 : vector<64x128xf32>
    %61 = arith.addf %54, %60 : vector<64x128xf32>
    %62 = vector.extract_strided_slice %14 {offsets = [16, 0], sizes = [64, 128], strides = [1, 1]} : vector<80x128xf32> to vector<64x128xf32>
    %63 = vector.extract_strided_slice %20 {offsets = [6, 0], sizes = [1, 128], strides = [1, 1]} : vector<9x128xf32> to vector<1x128xf32>
    %64 = vector.shape_cast %63 : vector<1x128xf32> to vector<128xf32>
    %65 = vector.shape_cast %64 : vector<128xf32> to vector<1x128xf32>
    %66 = vector.broadcast %65 : vector<1x128xf32> to vector<64x128xf32>
    %67 = arith.mulf %62, %66 : vector<64x128xf32>
    %68 = arith.addf %61, %67 : vector<64x128xf32>
    %69 = vector.extract_strided_slice %7 {offsets = [16, 0], sizes = [64, 128], strides = [1, 1]} : vector<80x128xf32> to vector<64x128xf32>
    %70 = vector.extract_strided_slice %20 {offsets = [7, 0], sizes = [1, 128], strides = [1, 1]} : vector<9x128xf32> to vector<1x128xf32>
    %71 = vector.shape_cast %70 : vector<1x128xf32> to vector<128xf32>
    %72 = vector.shape_cast %71 : vector<128xf32> to vector<1x128xf32>
    %73 = vector.broadcast %72 : vector<1x128xf32> to vector<64x128xf32>
    %74 = arith.mulf %69, %73 : vector<64x128xf32>
    %75 = arith.addf %68, %74 : vector<64x128xf32>
    %76 = vector.extract_strided_slice %19 {offsets = [16, 0], sizes = [64, 128], strides = [1, 1]} : vector<80x128xf32> to vector<64x128xf32>
    %77 = vector.extract_strided_slice %20 {offsets = [8, 0], sizes = [1, 128], strides = [1, 1]} : vector<9x128xf32> to vector<1x128xf32>
    %78 = vector.shape_cast %77 : vector<1x128xf32> to vector<128xf32>
    %79 = vector.shape_cast %78 : vector<128xf32> to vector<1x128xf32>
    %80 = vector.broadcast %79 : vector<1x128xf32> to vector<64x128xf32>
    %81 = arith.mulf %76, %80 : vector<64x128xf32>
    %82 = arith.addf %75, %81 : vector<64x128xf32>
    %c0_10 = arith.constant 0 : index
    %c0_11 = arith.constant 0 : index
    %83 = vector.load %arg4[%c0_10, %c0_11] : memref<1x128xf32, #tpu.memory_space<vmem>>, vector<1x128xf32>
    %84 = vector.broadcast %83 : vector<1x128xf32> to vector<64x128xf32>
    %85 = arith.addf %82, %84 : vector<64x128xf32>
    %cst_12 = arith.constant 5.000000e-01 : f32
    %86 = vector.broadcast %cst_12 : f32 to vector<64x128xf32>
    %87 = arith.mulf %86, %85 : vector<64x128xf32>
    %cst_13 = arith.constant 0.707106769 : f32
    %88 = vector.broadcast %cst_13 : f32 to vector<64x128xf32>
    %89 = arith.mulf %85, %88 : vector<64x128xf32>
    %90 = math.erf %89 : vector<64x128xf32>
    %cst_14 = arith.constant 1.000000e+00 : f32
    %91 = vector.broadcast %cst_14 : f32 to vector<64x128xf32>
    %92 = arith.addf %91, %90 : vector<64x128xf32>
    %93 = arith.mulf %87, %92 : vector<64x128xf32>
    %94 = arith.truncf %93 : vector<64x128xf32> to vector<64x128xbf16>
    %c0_15 = arith.constant 0 : index
    %c0_16 = arith.constant 0 : index
    %95 = vector.load %arg5[%c0_15, %c0_16] : memref<128x128xbf16, #tpu.memory_space<vmem>>, vector<128x128xbf16>
    %cst_17 = arith.constant dense<0.000000e+00> : vector<64x128xf32>
    %96 = tpu.matmul %94, %95, %cst_17 {dimension_numbers = #tpu.dot_dimension_numbers<[1], [0], [0], [1], [0, 0, 1, 1], [], []>} : vector<64x128xbf16>, vector<128x128xbf16>, vector<64x128xf32> -> vector<64x128xf32>
    %c0_18 = arith.constant 0 : index
    %c0_19 = arith.constant 0 : index
    %97 = vector.load %arg6[%c0_18, %c0_19] : memref<1x128xf32, #tpu.memory_space<vmem>>, vector<1x128xf32>
    %98 = vector.broadcast %97 : vector<1x128xf32> to vector<64x128xf32>
    %99 = arith.addf %96, %98 : vector<64x128xf32>
    %c0_20 = arith.constant 0 : index
    %c0_21 = arith.constant 0 : index
    %100 = vector.load %arg7[%c0_20, %c0_21] : memref<64x128xf32, #tpu.memory_space<vmem>>, vector<64x128xf32>
    tpu.vector_store %arg7[%c0_20, %c0_21], %99 {strides = array<i32>} : memref<64x128xf32, #tpu.memory_space<vmem>>, vector<64x128xf32>,
    return
  }
}

</mosaic_0001>

<llo_original>
// kernel: segformer_mix_ffn.1
$region0: #{segformer_mix_ffn.1}
  #allocation0 [shape = 'u32[]', space=smem, size = 0x4, offset = 0x4, fixed_abs, tag = 'smem constant byte address 0x4 - core index']
  #allocation1 [shape = 'u32[72,128]{1,0:T(1,128)}', space=vmem, size = 0x9000, scoped, tag = 'internal scratch']
  %s0 = inlined_call_operand.vmem [shape: bf16[64,128], index: 0, kind: input, shape index: {}]
  %s1 = inlined_call_operand.vmem [shape: bf16[128,128], index: 1, kind: input, shape index: {}]
  %s2 = inlined_call_operand.vmem [shape: f32[1,128], index: 2, kind: input, shape index: {}]
  %s3 = inlined_call_operand.vmem [shape: f32[9,128], index: 3, kind: input, shape index: {}]
  %s4 = inlined_call_operand.vmem [shape: f32[1,128], index: 4, kind: input, shape index: {}]
  %s5 = inlined_call_operand.vmem [shape: bf16[128,128], index: 5, kind: input, shape index: {}]
  %s6 = inlined_call_operand.vmem [shape: f32[1,128], index: 6, kind: input, shape index: {}]
  %s7 = inlined_call_operand.vmem [shape: f32[64,128], index: 7, kind: output, shape index: {}]
  %s8 = sld [smem:[#allocation0]]
  $region38: #{segformer_mix_ffn.1} parent=0
    _
  %s10 = ssub.s32 1, %s8
  %s11 = scalar_select 0, %s10, %s8
  // Predicated region
  $region2: #{segformer_mix_ffn.1} parent=0 // pred_check
    _
  $region3: #{segformer_mix_ffn.1} parent=0 // pred_check_branch
    %13 = sbr.rel (0) target = $region5
  $region4: #{segformer_mix_ffn.1} parent=0 // pred_region
    _
  $region5: #{segformer_mix_ffn.1} parent=0 // pred_fallthru
    _
  // Predicated region
  $region6: #{segformer_mix_ffn.1} parent=0 // pred_check
    _
  $region7: #{segformer_mix_ffn.1} parent=0 // pred_check_branch
    %15 = sbr.rel (0) target = $region9
  $region8: #{segformer_mix_ffn.1} parent=0 // pred_region
    _
  $region9: #{segformer_mix_ffn.1} parent=0 // pred_fallthru
    _
  // Predicated region
  $region10: #{segformer_mix_ffn.1} parent=0 // pred_check
    _
  $region11: #{segformer_mix_ffn.1} parent=0 // pred_check_branch
    %17 = sbr.rel (0) target = $region13
  $region12: #{segformer_mix_ffn.1} parent=0 // pred_region
    _
  $region13: #{segformer_mix_ffn.1} parent=0 // pred_fallthru
    _
  // Predicated region
  $region14: #{segformer_mix_ffn.1} parent=0 // pred_check
    _
  $region15: #{segformer_mix_ffn.1} parent=0 // pred_check_branch
    %19 = sbr.rel (0) target = $region17
  $region16: #{segformer_mix_ffn.1} parent=0 // pred_region
    _
  $region17: #{segformer_mix_ffn.1} parent=0 // pred_fallthru
    _
  // Predicated region
  $region18: #{segformer_mix_ffn.1} parent=0 // pred_check
    _
  $region19: #{segformer_mix_ffn.1} parent=0 // pred_check_branch
    %21 = sbr.rel (0) target = $region21
  $region20: #{segformer_mix_ffn.1} parent=0 // pred_region
    _
  $region21: #{segformer_mix_ffn.1} parent=0 // pred_fallthru
    _
  // Predicated region
  $region22: #{segformer_mix_ffn.1} parent=0 // pred_check
    _
  $region23: #{segformer_mix_ffn.1} parent=0 // pred_check_branch
    %23 = sbr.rel (0) target = $region25
  $region24: #{segformer_mix_ffn.1} parent=0 // pred_region
    _
  $region25: #{segformer_mix_ffn.1} parent=0 // pred_fallthru
    _
  // Predicated region
  $region26: #{segformer_mix_ffn.1} parent=0 // pred_check
    _
  $region27: #{segformer_mix_ffn.1} parent=0 // pred_check_branch
    %25 = sbr.rel (0) target = $region29
  $region28: #{segformer_mix_ffn.1} parent=0 // pred_region
    _
  $region29: #{segformer_mix_ffn.1} parent=0 // pred_fallthru
    _
  %v26 = vld [vmem:[%s0] sm:$0xf]
  %v27 = vld [vmem:[%s0 + $0x4] sm:$0xf]
  %v28 = vld [vmem:[%s0 + $0x8] sm:$0xf]
  %v29 = vld [vmem:[%s0 + $0xc] sm:$0xf]
  %v30 = vld [vmem:[%s0 + $0x10] sm:$0xf]
  %v31 = vld [vmem:[%s0 + $0x14] sm:$0xf]
  %v32 = vld [vmem:[%s0 + $0x18] sm:$0xf]
  %v33 = vld [vmem:[%s0 + $0x1c] sm:$0xf]
  %v34 = vld [vmem:[%s1] sm:$0xf]
  %v35 = vld [vmem:[%s1 + $0x4] sm:$0xf]
  %v36 = vld [vmem:[%s1 + $0x8] sm:$0xf]
  %v37 = vld [vmem:[%s1 + $0xc] sm:$0xf]
  %v38 = vld [vmem:[%s1 + $0x10] sm:$0xf]
  %v39 = vld [vmem:[%s1 + $0x14] sm:$0xf]
  %v40 = vld [vmem:[%s1 + $0x18] sm:$0xf]
  %v41 = vld [vmem:[%s1 + $0x1c] sm:$0xf]
  %v42 = vld [vmem:[%s1 + $0x20] sm:$0xf]
  %v43 = vld [vmem:[%s1 + $0x24] sm:$0xf]
  %v44 = vld [vmem:[%s1 + $0x28] sm:$0xf]
  %v45 = vld [vmem:[%s1 + $0x2c] sm:$0xf]
  %v46 = vld [vmem:[%s1 + $0x30] sm:$0xf]
  %v47 = vld [vmem:[%s1 + $0x34] sm:$0xf]
  %v48 = vld [vmem:[%s1 + $0x38] sm:$0xf]
  %v49 = vld [vmem:[%s1 + $0x3c] sm:$0xf]
  %v50 = vld [vmem:[%s2] sm:$0x1]
  %v52 = vperm.slane %v50, 0
  %v62 = vunpack.c.l.b16 %v26
  %v63 = vunpack.c.l.b16 %v27
  %v64 = vunpack.c.l.b16 %v28
  %v65 = vunpack.c.l.b16 %v29
  %v66 = vunpack.c.l.b16 %v30
  %v67 = vunpack.c.l.b16 %v31
  %v68 = vunpack.c.l.b16 %v32
  %v69 = vunpack.c.l.b16 %v33
  %v70 = vpack.c.b16 %v63, %v62
  %v71 = vpack.c.b16 %v65, %v64
  %v72 = vpack.c.b16 %v67, %v66
  %v73 = vpack.c.b16 %v69, %v68
  %v94 = vunpack.c.l.b16 %v34
  %v95 = vunpack.c.l.b16 %v35
  %v96 = vunpack.c.l.b16 %v36
  %v97 = vunpack.c.l.b16 %v37
  %v98 = vunpack.c.l.b16 %v38
  %v99 = vunpack.c.l.b16 %v39
  %v100 = vunpack.c.l.b16 %v40
  %v101 = vunpack.c.l.b16 %v41
  %v102 = vunpack.c.l.b16 %v42
  %v103 = vunpack.c.l.b16 %v43
  %v104 = vunpack.c.l.b16 %v44
  %v105 = vunpack.c.l.b16 %v45
  %v106 = vunpack.c.l.b16 %v46
  %v107 = vunpack.c.l.b16 %v47
  %v108 = vunpack.c.l.b16 %v48
  %v109 = vunpack.c.l.b16 %v49
  %v110 = vpack.c.b16 %v95, %v94
  %v111 = vpack.c.b16 %v97, %v96
  %v112 = vpack.c.b16 %v99, %v98
  %v113 = vpack.c.b16 %v101, %v100
  %v114 = vpack.c.b16 %v103, %v102
  %v115 = vpack.c.b16 %v105, %v104
  %v116 = vpack.c.b16 %v107, %v106
  %v117 = vpack.c.b16 %v109, %v108
  %126 = vmatpush.bf16.msra.mxu0 %v117
  %127 = vmatpush.bf16.msra.mxu0 %v116
  %128 = vmatpush.bf16.msra.mxu0 %v115
  %129 = vmatpush.bf16.msra.mxu0 %v114
  %130 = vmatpush.bf16.msra.mxu0 %v113
  %131 = vmatpush.bf16.msra.mxu0 %v112
  %132 = vmatpush.bf16.msra.mxu0 %v111
  %133 = vmatpush.bf16.msra.mxu0 %v110
  %134 = vmatmul.bf16.gmra.mxu0 %v70
  %v135 = vpop.f32.mrf.mxu0
  %v136 = vadd.f32 %v52, %v135
  %v137 = vpop.f32.mrf.mxu0
  %v138 = vadd.f32 %v52, %v137
  %139 = vmatmul.bf16.gmra.mxu0 %v71
  %v140 = vpop.f32.mrf.mxu0
  %v141 = vadd.f32 %v52, %v140
  %v142 = vpop.f32.mrf.mxu0
  %v143 = vadd.f32 %v52, %v142
  %144 = vmatmul.bf16.gmra.mxu0 %v72
  %v145 = vpop.f32.mrf.mxu0
  %v146 = vadd.f32 %v52, %v145
  %v147 = vpop.f32.mrf.mxu0
  %v148 = vadd.f32 %v52, %v147
  %149 = vmatmul.bf16.gmra.mxu0 %v73
  %v150 = vpop.f32.mrf.mxu0
  %v151 = vadd.f32 %v52, %v150
  %v152 = vpop.f32.mrf.mxu0
  %v153 = vadd.f32 %v52, %v152
  %154 = vdwg.mxu0
  %v155 = vlaneseq
  %v156 = vshrl.u32 %v155, 7
  %vm157 = vcmp.eq.s32.totalorder %v156, 0
  %v158 = vrot.slane %v136, 7
  %v159 = vrot.slane %v138, 7
  %v160 = vrot.slane %v141, 7
  %v161 = vrot.slane %v143, 7
  %v162 = vrot.slane %v146, 7
  %v163 = vrot.slane %v148, 7
  %v164 = vrot.slane %v151, 7
  %v165 = vrot.slane %v153, 7
  %vm166 = vcmp.lt.s32.totalorder %v156, 1
  %v167 = vsel %vm166, %v165, 0.0
  %v168 = vsel %vm166, %v164, %v165
  %v169 = vsel %vm166, %v163, %v164
  %v170 = vsel %vm166, %v162, %v163
  %v171 = vsel %vm166, %v161, %v162
  %v172 = vsel %vm166, %v160, %v161
  %v173 = vsel %vm166, %v159, %v160
  %v174 = vsel %vm166, %v158, %v159
  %v175 = vsel %vm166, 0.0, %v158
  %v176 = vsel %vm157, 0.0, 0.0
  %v177 = vsel %vm157, 0.0, %v175
  %v178 = vsel %vm157, 0.0, %v174
  %v179 = vsel %vm157, 0.0, %v173
  %v180 = vsel %vm157, 0.0, %v172
  %v181 = vsel %vm157, 0.0, %v171
  %v182 = vsel %vm157, 0.0, %v170
  %v183 = vsel %vm157, 0.0, %v169
  %v184 = vsel %vm157, 0.0, %v168
  %v185 = vsel %vm157, 0.0, %v167
  %vm186 = vcmp.eq.s32.totalorder %v156, 7
  %v187 = vrot.slane %v136, 1
  %v188 = vrot.slane %v138, 1
  %v189 = vrot.slane %v141, 1
  %v190 = vrot.slane %v143, 1
  %v191 = vrot.slane %v146, 1
  %v192 = vrot.slane %v148, 1
  %v193 = vrot.slane %v151, 1
  %v194 = vrot.slane %v153, 1
  %vm195 = vcmp.lt.s32.totalorder %v156, 7
  %v196 = vsel %vm195, %v194, 0.0
  %v197 = vsel %vm195, %v193, %v194
  %v198 = vsel %vm195, %v192, %v193
  %v199 = vsel %vm195, %v191, %v192
  %v200 = vsel %vm195, %v190, %v191
  %v201 = vsel %vm195, %v189, %v190
  %v202 = vsel %vm195, %v188, %v189
  %v203 = vsel %vm195, %v187, %v188
  %v204 = vsel %vm195, 0.0, %v187
  %v205 = vsel %vm186, 0.0, %v204
  %v206 = vsel %vm186, 0.0, %v203
  %v207 = vsel %vm186, 0.0, %v202
  %v208 = vsel %vm186, 0.0, %v201
  %v209 = vsel %vm186, 0.0, %v200
  %v210 = vsel %vm186, 0.0, %v199
  %v211 = vsel %vm186, 0.0, %v198
  %v212 = vsel %vm186, 0.0, %v197
  %v213 = vsel %vm186, 0.0, %v196
  %v214 = vsel %vm186, 0.0, 0.0
  %v215 = vld [vmem:[%s3] sm:$0xff]
  %v216 = vld [vmem:[%s3 + $0x8] sm:$0x1]
  %v217 = vperm.slane %v215, 0
  %v218 = vmul.f32 %v176, %v217
  %v219 = vmul.f32 %v177, %v217
  %v220 = vmul.f32 %v178, %v217
  %v221 = vmul.f32 %v179, %v217
  %v222 = vmul.f32 %v180, %v217
  %v223 = vmul.f32 %v181, %v217
  %v224 = vmul.f32 %v182, %v217
  %v225 = vmul.f32 %v183, %v217
  %v226 = vperm.slane %v215, 1
  %v227 = vmul.f32 %v226, 0.0
  %v228 = vmul.f32 %v136, %v226
  %v229 = vmul.f32 %v138, %v226
  %v230 = vmul.f32 %v141, %v226
  %v231 = vmul.f32 %v143, %v226
  %v232 = vmul.f32 %v146, %v226
  %v233 = vmul.f32 %v148, %v226
  %v234 = vmul.f32 %v151, %v226
  %v235 = vadd.f32 %v218, %v227
  %v236 = vadd.f32 %v219, %v228
  %v237 = vadd.f32 %v220, %v229
  %v238 = vadd.f32 %v221, %v230
  %v239 = vadd.f32 %v222, %v231
  %v240 = vadd.f32 %v223, %v232
  %v241 = vadd.f32 %v224, %v233
  %v242 = vadd.f32 %v225, %v234
  %v243 = vperm.slane %v215, 2
  %v244 = vmul.f32 %v205, %v243
  %v245 = vmul.f32 %v206, %v243
  %v246 = vmul.f32 %v207, %v243
  %v247 = vmul.f32 %v208, %v243
  %v248 = vmul.f32 %v209, %v243
  %v249 = vmul.f32 %v210, %v243
  %v250 = vmul.f32 %v211, %v243
  %v251 = vmul.f32 %v212, %v243
  %v252 = vadd.f32 %v235, %v244
  %v253 = vadd.f32 %v236, %v245
  %v254 = vadd.f32 %v237, %v246
  %v255 = vadd.f32 %v238, %v247
  %v256 = vadd.f32 %v239, %v248
  %v257 = vadd.f32 %v240, %v249
  %v258 = vadd.f32 %v241, %v250
  %v259 = vadd.f32 %v242, %v251
  %v260 = vperm.slane %v215, 3
  %v261 = vmul.f32 %v177, %v260
  %v262 = vmul.f32 %v178, %v260
  %v263 = vmul.f32 %v179, %v260
  %v264 = vmul.f32 %v180, %v260
  %v265 = vmul.f32 %v181, %v260
  %v266 = vmul.f32 %v182, %v260
  %v267 = vmul.f32 %v183, %v260
  %v268 = vmul.f32 %v184, %v260
  %v269 = vadd.f32 %v252, %v261
  %v270 = vadd.f32 %v253, %v262
  %v271 = vadd.f32 %v254, %v263
  %v272 = vadd.f32 %v255, %v264
  %v273 = vadd.f32 %v256, %v265
  %v274 = vadd.f32 %v257, %v266
  %v275 = vadd.f32 %v258, %v267
  %v276 = vadd.f32 %v259, %v268
  %v277 = vperm.slane %v215, 4
  %v278 = vmul.f32 %v136, %v277
  %v279 = vmul.f32 %v138, %v277
  %v280 = vmul.f32 %v141, %v277
  %v281 = vmul.f32 %v143, %v277
  %v282 = vmul.f32 %v146, %v277
  %v283 = vmul.f32 %v148, %v277
  %v284 = vmul.f32 %v151, %v277
  %v285 = vmul.f32 %v153, %v277
  %v286 = vadd.f32 %v269, %v278
  %v287 = vadd.f32 %v270, %v279
  %v288 = vadd.f32 %v271, %v280
  %v289 = vadd.f32 %v272, %v281
  %v290 = vadd.f32 %v273, %v282
  %v291 = vadd.f32 %v274, %v283
  %v292 = vadd.f32 %v275, %v284
  %v293 = vadd.f32 %v276, %v285
  %v294 = vperm.slane %v215, 5
  %v295 = vmul.f32 %v206, %v294
  %v296 = vmul.f32 %v207, %v294
  %v297 = vmul.f32 %v208, %v294
  %v298 = vmul.f32 %v209, %v294
  %v299 = vmul.f32 %v210, %v294
  %v300 = vmul.f32 %v211, %v294
  %v301 = vmul.f32 %v212, %v294
  %v302 = vmul.f32 %v213, %v294
  %v303 = vadd.f32 %v286, %v295
  %v304 = vadd.f32 %v287, %v296
  %v305 = vadd.f32 %v288, %v297
  %v306 = vadd.f32 %v289, %v298
  %v307 = vadd.f32 %v290, %v299
  %v308 = vadd.f32 %v291, %v300
  %v309 = vadd.f32 %v292, %v301
  %v310 = vadd.f32 %v293, %v302
  %v311 = vperm.slane %v215, 6
  %v312 = vmul.f32 %v178, %v311
  %v313 = vmul.f32 %v179, %v311
  %v314 = vmul.f32 %v180, %v311
  %v315 = vmul.f32 %v181, %v311
  %v316 = vmul.f32 %v182, %v311
  %v317 = vmul.f32 %v183, %v311
  %v318 = vmul.f32 %v184, %v311
  %v319 = vmul.f32 %v185, %v311
  %v320 = vadd.f32 %v303, %v312
  %v321 = vadd.f32 %v304, %v313
  %v322 = vadd.f32 %v305, %v314
  %v323 = vadd.f32 %v306, %v315
  %v324 = vadd.f32 %v307, %v316
  %v325 = vadd.f32 %v308, %v317
  %v326 = vadd.f32 %v309, %v318
  %v327 = vadd.f32 %v310, %v319
  %v328 = vperm.slane %v215, 7
  %v329 = vmul.f32 %v138, %v328
  %v330 = vmul.f32 %v141, %v328
  %v331 = vmul.f32 %v143, %v328
  %v332 = vmul.f32 %v146, %v328
  %v333 = vmul.f32 %v148, %v328
  %v334 = vmul.f32 %v151, %v328
  %v335 = vmul.f32 %v153, %v328
  %v336 = vmul.f32 %v328, 0.0
  %v337 = vadd.f32 %v320, %v329
  %v338 = vadd.f32 %v321, %v330
  %v339 = vadd.f32 %v322, %v331
  %v340 = vadd.f32 %v323, %v332
  %v341 = vadd.f32 %v324, %v333
  %v342 = vadd.f32 %v325, %v334
  %v343 = vadd.f32 %v326, %v335
  %v344 = vadd.f32 %v327, %v336
  %v345 = vperm.slane %v216, 0
  %v346 = vmul.f32 %v207, %v345
  %v347 = vmul.f32 %v208, %v345
  %v348 = vmul.f32 %v209, %v345
  %v349 = vmul.f32 %v210, %v345
  %v350 = vmul.f32 %v211, %v345
  %v351 = vmul.f32 %v212, %v345
  %v352 = vmul.f32 %v213, %v345
  %v353 = vmul.f32 %v214, %v345
  %v354 = vadd.f32 %v337, %v346
  %v355 = vadd.f32 %v338, %v347
  %v356 = vadd.f32 %v339, %v348
  %v357 = vadd.f32 %v340, %v349
  %v358 = vadd.f32 %v341, %v350
  %v359 = vadd.f32 %v342, %v351
  %v360 = vadd.f32 %v343, %v352
  %v361 = vadd.f32 %v344, %v353
  %v362 = vld [vmem:[%s4] sm:$0x1]
  %v364 = vperm.slane %v362, 0
  %v366 = vadd.f32 %v354, %v364
  %v367 = vadd.f32 %v355, %v364
  %v368 = vadd.f32 %v356, %v364
  %v369 = vadd.f32 %v357, %v364
  %v370 = vadd.f32 %v358, %v364
  %v371 = vadd.f32 %v359, %v364
  %v372 = vadd.f32 %v360, %v364
  %v373 = vadd.f32 %v361, %v364
  %v374 = vmul.f32 %v366, 0.5
  %v375 = vmul.f32 %v367, 0.5
  %v376 = vmul.f32 %v368, 0.5
  %v377 = vmul.f32 %v369, 0.5
  %v378 = vmul.f32 %v370, 0.5
  %v379 = vmul.f32 %v371, 0.5
  %v380 = vmul.f32 %v372, 0.5
  %v381 = vmul.f32 %v373, 0.5
  %v382 = vmul.f32 %v366, 0.70710677
  %v383 = vmul.f32 %v367, 0.70710677
  %v384 = vmul.f32 %v368, 0.70710677
  %v385 = vmul.f32 %v369, 0.70710677
  %v386 = vmul.f32 %v370, 0.70710677
  %v387 = vmul.f32 %v371, 0.70710677
  %v388 = vmul.f32 %v372, 0.70710677
  %v389 = vmul.f32 %v373, 0.70710677
  %v390 = vmul.f32 %v382, %v382
  %v391 = vmin.f32 16.0, %v390
  %v392 = vmul.f32 %v391, 2.1237322e-06
  %v393 = vadd.f32 %v392, 0.00028619796
  %v394 = vmul.f32 %v391, %v393
  %v395 = vadd.f32 %v394, 0.0036580483
  %v396 = vmul.f32 %v391, %v395
  %v397 = vadd.f32 %v396, 0.05243302
  %v398 = vmul.f32 %v391, %v397
  %v399 = vadd.f32 %v398, 0.18741608
  %v400 = vmul.f32 %v391, %v399
  %v401 = vadd.f32 %v400, 1.1283791
  %v402 = vmul.f32 %v382, %v401
  %v403 = vmul.f32 %v391, 3.8918573e-05
  %v404 = vadd.f32 %v403, 0.001143296
  %v405 = vmul.f32 %v391, %v404
  %v406 = vadd.f32 %v405, 0.014752088
  %v407 = vmul.f32 %v391, %v406
  %v408 = vadd.f32 %v407, 0.112945676
  %v409 = vmul.f32 %v391, %v408
  %v410 = vadd.f32 %v409, 0.4994258
  %v411 = vmul.f32 %v391, %v410
  %v412 = vadd.f32 %v411, 1.0
  %v413 = vrcp.pop %v412
  %v414 = vmul.f32 %v412, %v413
  %v415 = vsub.f32 1.0, %v414
  %v416 = vmul.f32 %v413, %v415
  %v417 = vadd.f32 %v413, %v416
  %vm418 = vweird.f32 %v412
  %vm419 = vweird.f32 %v413
  %vm420 = vmor %vm418, %vm419
  %v421 = vsel %vm420, %v413, %v417
  %v422 = vand.u32 2147483647, %v412
  %vm423 = vcmp.eq.f32.partialorder %v422, 8.507059e+37
  %v424 = vand.u32 %v412, 2147483648
  %v425 = vor.u32 1.1754944e-38, %v424
  %v426 = vsel %vm423, %v425, %v421
  %v427 = vmul.f32 %v402, %v426
  %v428 = vmin.f32 %v427, 1.0
  %v429 = vmax.f32 %v428, -1.0
  %v430 = vmul.f32 %v383, %v383
  %v431 = vmin.f32 16.0, %v430
  %v432 = vmul.f32 %v431, 2.1237322e-06
  %v433 = vadd.f32 %v432, 0.00028619796
  %v434 = vmul.f32 %v431, %v433
  %v435 = vadd.f32 %v434, 0.0036580483
  %v436 = vmul.f32 %v431, %v435
  %v437 = vadd.f32 %v436, 0.05243302
  %v438 = vmul.f32 %v431, %v437
  %v439 = vadd.f32 %v438, 0.18741608
  %v440 = vmul.f32 %v431, %v439
  %v441 = vadd.f32 %v440, 1.1283791
  %v442 = vmul.f32 %v383, %v441
  %v443 = vmul.f32 %v431, 3.8918573e-05
  %v444 = vadd.f32 %v443, 0.001143296
  %v445 = vmul.f32 %v431, %v444
  %v446 = vadd.f32 %v445, 0.014752088
  %v447 = vmul.f32 %v431, %v446
  %v448 = vadd.f32 %v447, 0.112945676
  %v449 = vmul.f32 %v431, %v448
  %v450 = vadd.f32 %v449, 0.4994258
  %v451 = vmul.f32 %v431, %v450
  %v452 = vadd.f32 %v451, 1.0
  %v453 = vrcp.pop %v452
  %v454 = vmul.f32 %v452, %v453
  %v455 = vsub.f32 1.0, %v454
  %v456 = vmul.f32 %v453, %v455
  %v457 = vadd.f32 %v453, %v456
  %vm458 = vweird.f32 %v452
  %vm459 = vweird.f32 %v453
  %vm460 = vmor %vm458, %vm459
  %v461 = vsel %vm460, %v453, %v457
  %v462 = vand.u32 2147483647, %v452
  %vm463 = vcmp.eq.f32.partialorder %v462, 8.507059e+37
  %v464 = vand.u32 %v452, 2147483648
  %v465 = vor.u32 1.1754944e-38, %v464
  %v466 = vsel %vm463, %v465, %v461
  %v467 = vmul.f32 %v442, %v466
  %v468 = vmin.f32 %v467, 1.0
  %v469 = vmax.f32 %v468, -1.0
  %v470 = vmul.f32 %v384, %v384
  %v471 = vmin.f32 16.0, %v470
  %v472 = vmul.f32 %v471, 2.1237322e-06
  %v473 = vadd.f32 %v472, 0.00028619796
  %v474 = vmul.f32 %v471, %v473
  %v475 = vadd.f32 %v474, 0.0036580483
  %v476 = vmul.f32 %v471, %v475
  %v477 = vadd.f32 %v476, 0.05243302
  %v478 = vmul.f32 %v471, %v477
  %v479 = vadd.f32 %v478, 0.18741608
  %v480 = vmul.f32 %v471, %v479
  %v481 = vadd.f32 %v480, 1.1283791
  %v482 = vmul.f32 %v384, %v481
  %v483 = vmul.f32 %v471, 3.8918573e-05
  %v484 = vadd.f32 %v483, 0.001143296
  %v485 = vmul.f32 %v471, %v484
  %v486 = vadd.f32 %v485, 0.014752088
  %v487 = vmul.f32 %v471, %v486
  %v488 = vadd.f32 %v487, 0.112945676
  %v489 = vmul.f32 %v471, %v488
  %v490 = vadd.f32 %v489, 0.4994258
  %v491 = vmul.f32 %v471, %v490
  %v492 = vadd.f32 %v491, 1.0
  %v493 = vrcp.pop %v492
  %v494 = vmul.f32 %v492, %v493
  %v495 = vsub.f32 1.0, %v494
  %v496 = vmul.f32 %v493, %v495
  %v497 = vadd.f32 %v493, %v496
  %vm498 = vweird.f32 %v492
  %vm499 = vweird.f32 %v493
  %vm500 = vmor %vm498, %vm499
  %v501 = vsel %vm500, %v493, %v497
  %v502 = vand.u32 2147483647, %v492
  %vm503 = vcmp.eq.f32.partialorder %v502, 8.507059e+37
  %v504 = vand.u32 %v492, 2147483648
  %v505 = vor.u32 1.1754944e-38, %v504
  %v506 = vsel %vm503, %v505, %v501
  %v507 = vmul.f32 %v482, %v506
  %v508 = vmin.f32 %v507, 1.0
  %v509 = vmax.f32 %v508, -1.0
  %v510 = vmul.f32 %v385, %v385
  %v511 = vmin.f32 16.0, %v510
  %v512 = vmul.f32 %v511, 2.1237322e-06
  %v513 = vadd.f32 %v512, 0.00028619796
  %v514 = vmul.f32 %v511, %v513
  %v515 = vadd.f32 %v514, 0.0036580483
  %v516 = vmul.f32 %v511, %v515
  %v517 = vadd.f32 %v516, 0.05243302
  %v518 = vmul.f32 %v511, %v517
  %v519 = vadd.f32 %v518, 0.18741608
  %v520 = vmul.f32 %v511, %v519
  %v521 = vadd.f32 %v520, 1.1283791
  %v522 = vmul.f32 %v385, %v521
  %v523 = vmul.f32 %v511, 3.8918573e-05
  %v524 = vadd.f32 %v523, 0.001143296
  %v525 = vmul.f32 %v511, %v524
  %v526 = vadd.f32 %v525, 0.014752088
  %v527 = vmul.f32 %v511, %v526
  %v528 = vadd.f32 %v527, 0.112945676
  %v529 = vmul.f32 %v511, %v528
  %v530 = vadd.f32 %v529, 0.4994258
  %v531 = vmul.f32 %v511, %v530
  %v532 = vadd.f32 %v531, 1.0
  %v533 = vrcp.pop %v532
  %v534 = vmul.f32 %v532, %v533
  %v535 = vsub.f32 1.0, %v534
  %v536 = vmul.f32 %v533, %v535
  %v537 = vadd.f32 %v533, %v536
  %vm538 = vweird.f32 %v532
  %vm539 = vweird.f32 %v533
  %vm540 = vmor %vm538, %vm539
  %v541 = vsel %vm540, %v533, %v537
  %v542 = vand.u32 2147483647, %v532
  %vm543 = vcmp.eq.f32.partialorder %v542, 8.507059e+37
  %v544 = vand.u32 %v532, 2147483648
  %v545 = vor.u32 1.1754944e-38, %v544
  %v546 = vsel %vm543, %v545, %v541
  %v547 = vmul.f32 %v522, %v546
  %v548 = vmin.f32 %v547, 1.0
  %v549 = vmax.f32 %v548, -1.0
  %v550 = vmul.f32 %v386, %v386
  %v551 = vmin.f32 16.0, %v550
  %v552 = vmul.f32 %v551, 2.1237322e-06
  %v553 = vadd.f32 %v552, 0.00028619796
  %v554 = vmul.f32 %v551, %v553
  %v555 = vadd.f32 %v554, 0.0036580483
  %v556 = vmul.f32 %v551, %v555
  %v557 = vadd.f32 %v556, 0.05243302
  %v558 = vmul.f32 %v551, %v557
  %v559 = vadd.f32 %v558, 0.18741608
  %v560 = vmul.f32 %v551, %v559
  %v561 = vadd.f32 %v560, 1.1283791
  %v562 = vmul.f32 %v386, %v561
  %v563 = vmul.f32 %v551, 3.8918573e-05
  %v564 = vadd.f32 %v563, 0.001143296
  %v565 = vmul.f32 %v551, %v564
  %v566 = vadd.f32 %v565, 0.014752088
  %v567 = vmul.f32 %v551, %v566
  %v568 = vadd.f32 %v567, 0.112945676
  %v569 = vmul.f32 %v551, %v568
  %v570 = vadd.f32 %v569, 0.4994258
  %v571 = vmul.f32 %v551, %v570
  %v572 = vadd.f32 %v571, 1.0
  %v573 = vrcp.pop %v572
  %v574 = vmul.f32 %v572, %v573
  %v575 = vsub.f32 1.0, %v574
  %v576 = vmul.f32 %v573, %v575
  %v577 = vadd.f32 %v573, %v576
  %vm578 = vweird.f32 %v572
  %vm579 = vweird.f32 %v573
  %vm580 = vmor %vm578, %vm579
  %v581 = vsel %vm580, %v573, %v577
  %v582 = vand.u32 2147483647, %v572
  %vm583 = vcmp.eq.f32.partialorder %v582, 8.507059e+37
  %v584 = vand.u32 %v572, 2147483648
  %v585 = vor.u32 1.1754944e-38, %v584
  %v586 = vsel %vm583, %v585, %v581
  %v587 = vmul.f32 %v562, %v586
  %v588 = vmin.f32 %v587, 1.0
  %v589 = vmax.f32 %v588, -1.0
  %v590 = vmul.f32 %v387, %v387
  %v591 = vmin.f32 16.0, %v590
  %v592 = vmul.f32 %v591, 2.1237322e-06
  %v593 = vadd.f32 %v592, 0.00028619796
  %v594 = vmul.f32 %v591, %v593
  %v595 = vadd.f32 %v594, 0.0036580483
  %v596 = vmul.f32 %v591, %v595
  %v597 = vadd.f32 %v596, 0.05243302
  %v598 = vmul.f32 %v591, %v597
  %v599 = vadd.f32 %v598, 0.18741608
  %v600 = vmul.f32 %v591, %v599
  %v601 = vadd.f32 %v600, 1.1283791
  %v602 = vmul.f32 %v387, %v601
  %v603 = vmul.f32 %v591, 3.8918573e-05
  %v604 = vadd.f32 %v603, 0.001143296
  %v605 = vmul.f32 %v591, %v604
  %v606 = vadd.f32 %v605, 0.014752088
  %v607 = vmul.f32 %v591, %v606
  %v608 = vadd.f32 %v607, 0.112945676
  %v609 = vmul.f32 %v591, %v608
  %v610 = vadd.f32 %v609, 0.4994258
  %v611 = vmul.f32 %v591, %v610
  %v612 = vadd.f32 %v611, 1.0
  %v613 = vrcp.pop %v612
  %v614 = vmul.f32 %v612, %v613
  %v615 = vsub.f32 1.0, %v614
  %v616 = vmul.f32 %v613, %v615
  %v617 = vadd.f32 %v613, %v616
  %vm618 = vweird.f32 %v612
  %vm619 = vweird.f32 %v613
  %vm620 = vmor %vm618, %vm619
  %v621 = vsel %vm620, %v613, %v617
  %v622 = vand.u32 2147483647, %v612
  %vm623 = vcmp.eq.f32.partialorder %v622, 8.507059e+37
  %v624 = vand.u32 %v612, 2147483648
  %v625 = vor.u32 1.1754944e-38, %v624
  %v626 = vsel %vm623, %v625, %v621
  %v627 = vmul.f32 %v602, %v626
  %v628 = vmin.f32 %v627, 1.0
  %v629 = vmax.f32 %v628, -1.0
  %v630 = vmul.f32 %v388, %v388
  %v631 = vmin.f32 16.0, %v630
  %v632 = vmul.f32 %v631, 2.1237322e-06
  %v633 = vadd.f32 %v632, 0.00028619796
  %v634 = vmul.f32 %v631, %v633
  %v635 = vadd.f32 %v634, 0.0036580483
  %v636 = vmul.f32 %v631, %v635
  %v637 = vadd.f32 %v636, 0.05243302
  %v638 = vmul.f32 %v631, %v637
  %v639 = vadd.f32 %v638, 0.18741608
  %v640 = vmul.f32 %v631, %v639
  %v641 = vadd.f32 %v640, 1.1283791
  %v642 = vmul.f32 %v388, %v641
  %v643 = vmul.f32 %v631, 3.8918573e-05
  %v644 = vadd.f32 %v643, 0.001143296
  %v645 = vmul.f32 %v631, %v644
  %v646 = vadd.f32 %v645, 0.014752088
  %v647 = vmul.f32 %v631, %v646
  %v648 = vadd.f32 %v647, 0.112945676
  %v649 = vmul.f32 %v631, %v648
  %v650 = vadd.f32 %v649, 0.4994258
  %v651 = vmul.f32 %v631, %v650
  %v652 = vadd.f32 %v651, 1.0
  %v653 = vrcp.pop %v652
  %v654 = vmul.f32 %v652, %v653
  %v655 = vsub.f32 1.0, %v654
  %v656 = vmul.f32 %v653, %v655
  %v657 = vadd.f32 %v653, %v656
  %vm658 = vweird.f32 %v652
  %vm659 = vweird.f32 %v653
  %vm660 = vmor %vm658, %vm659
  %v661 = vsel %vm660, %v653, %v657
  %v662 = vand.u32 2147483647, %v652
  %vm663 = vcmp.eq.f32.partialorder %v662, 8.507059e+37
  %v664 = vand.u32 %v652, 2147483648
  %v665 = vor.u32 1.1754944e-38, %v664
  %v666 = vsel %vm663, %v665, %v661
  %v667 = vmul.f32 %v642, %v666
  %v668 = vmin.f32 %v667, 1.0
  %v669 = vmax.f32 %v668, -1.0
  %v670 = vmul.f32 %v389, %v389
  %v671 = vmin.f32 16.0, %v670
  %v672 = vmul.f32 %v671, 2.1237322e-06
  %v673 = vadd.f32 %v672, 0.00028619796
  %v674 = vmul.f32 %v671, %v673
  %v675 = vadd.f32 %v674, 0.0036580483
  %v676 = vmul.f32 %v671, %v675
  %v677 = vadd.f32 %v676, 0.05243302
  %v678 = vmul.f32 %v671, %v677
  %v679 = vadd.f32 %v678, 0.18741608
  %v680 = vmul.f32 %v671, %v679
  %v681 = vadd.f32 %v680, 1.1283791
  %v682 = vmul.f32 %v389, %v681
  %v683 = vmul.f32 %v671, 3.8918573e-05
  %v684 = vadd.f32 %v683, 0.001143296
  %v685 = vmul.f32 %v671, %v684
  %v686 = vadd.f32 %v685, 0.014752088
  %v687 = vmul.f32 %v671, %v686
  %v688 = vadd.f32 %v687, 0.112945676
  %v689 = vmul.f32 %v671, %v688
  %v690 = vadd.f32 %v689, 0.4994258
  %v691 = vmul.f32 %v671, %v690
  %v692 = vadd.f32 %v691, 1.0
  %v693 = vrcp.pop %v692
  %v694 = vmul.f32 %v692, %v693
  %v695 = vsub.f32 1.0, %v694
  %v696 = vmul.f32 %v693, %v695
  %v697 = vadd.f32 %v693, %v696
  %vm698 = vweird.f32 %v692
  %vm699 = vweird.f32 %v693
  %vm700 = vmor %vm698, %vm699
  %v701 = vsel %vm700, %v693, %v697
  %v702 = vand.u32 2147483647, %v692
  %vm703 = vcmp.eq.f32.partialorder %v702, 8.507059e+37
  %v704 = vand.u32 %v692, 2147483648
  %v705 = vor.u32 1.1754944e-38, %v704
  %v706 = vsel %vm703, %v705, %v701
  %v707 = vmul.f32 %v682, %v706
  %v708 = vmin.f32 %v707, 1.0
  %v709 = vmax.f32 %v708, -1.0
  %v710 = vadd.f32 %v429, 1.0
  %v711 = vadd.f32 %v469, 1.0
  %v712 = vadd.f32 %v509, 1.0
  %v713 = vadd.f32 %v549, 1.0
  %v714 = vadd.f32 %v589, 1.0
  %v715 = vadd.f32 %v629, 1.0
  %v716 = vadd.f32 %v669, 1.0
  %v717 = vadd.f32 %v709, 1.0
  %v718 = vmul.f32 %v374, %v710
  %v719 = vmul.f32 %v375, %v711
  %v720 = vmul.f32 %v376, %v712
  %v721 = vmul.f32 %v377, %v713
  %v722 = vmul.f32 %v378, %v714
  %v723 = vmul.f32 %v379, %v715
  %v724 = vmul.f32 %v380, %v716
  %v725 = vmul.f32 %v381, %v717
  %v726 = vpack.c.bf16 %v719, %v718
  %v727 = vpack.c.bf16 %v721, %v720
  %v728 = vpack.c.bf16 %v723, %v722
  %v729 = vpack.c.bf16 %v725, %v724
  %v730 = vld [vmem:[%s5] sm:$0xf]
  %v731 = vld [vmem:[%s5 + $0x4] sm:$0xf]
  %v732 = vld [vmem:[%s5 + $0x8] sm:$0xf]
  %v733 = vld [vmem:[%s5 + $0xc] sm:$0xf]
  %v734 = vld [vmem:[%s5 + $0x10] sm:$0xf]
  %v735 = vld [vmem:[%s5 + $0x14] sm:$0xf]
  %v736 = vld [vmem:[%s5 + $0x18] sm:$0xf]
  %v737 = vld [vmem:[%s5 + $0x1c] sm:$0xf]
  %v738 = vld [vmem:[%s5 + $0x20] sm:$0xf]
  %v739 = vld [vmem:[%s5 + $0x24] sm:$0xf]
  %v740 = vld [vmem:[%s5 + $0x28] sm:$0xf]
  %v741 = vld [vmem:[%s5 + $0x2c] sm:$0xf]
  %v742 = vld [vmem:[%s5 + $0x30] sm:$0xf]
  %v743 = vld [vmem:[%s5 + $0x34] sm:$0xf]
  %v744 = vld [vmem:[%s5 + $0x38] sm:$0xf]
  %v745 = vld [vmem:[%s5 + $0x3c] sm:$0xf]
  %v746 = vld [vmem:[%s6] sm:$0x1]
  %v748 = vperm.slane %v746, 0
  %v766 = vunpack.c.l.b16 %v730
  %v767 = vunpack.c.l.b16 %v731
  %v768 = vunpack.c.l.b16 %v732
  %v769 = vunpack.c.l.b16 %v733
  %v770 = vunpack.c.l.b16 %v734
  %v771 = vunpack.c.l.b16 %v735
  %v772 = vunpack.c.l.b16 %v736
  %v773 = vunpack.c.l.b16 %v737
  %v774 = vunpack.c.l.b16 %v738
  %v775 = vunpack.c.l.b16 %v739
  %v776 = vunpack.c.l.b16 %v740
  %v777 = vunpack.c.l.b16 %v741
  %v778 = vunpack.c.l.b16 %v742
  %v779 = vunpack.c.l.b16 %v743
  %v780 = vunpack.c.l.b16 %v744
  %v781 = vunpack.c.l.b16 %v745
  %v782 = vpack.c.b16 %v767, %v766
  %v783 = vpack.c.b16 %v769, %v768
  %v784 = vpack.c.b16 %v771, %v770
  %v785 = vpack.c.b16 %v773, %v772
  %v786 = vpack.c.b16 %v775, %v774
  %v787 = vpack.c.b16 %v777, %v776
  %v788 = vpack.c.b16 %v779, %v778
  %v789 = vpack.c.b16 %v781, %v780
  %798 = vmatpush.bf16.msra.mxu0 %v789
  %799 = vmatpush.bf16.msra.mxu0 %v788
  %800 = vmatpush.bf16.msra.mxu0 %v787
  %801 = vmatpush.bf16.msra.mxu0 %v786
  %802 = vmatpush.bf16.msra.mxu0 %v785
  %803 = vmatpush.bf16.msra.mxu0 %v784
  %804 = vmatpush.bf16.msra.mxu0 %v783
  %805 = vmatpush.bf16.msra.mxu0 %v782
  %806 = vmatmul.bf16.gmra.mxu0 %v726
  %v807 = vpop.f32.mrf.mxu0
  %v808 = vadd.f32 %v748, %v807
  %v809 = vpop.f32.mrf.mxu0
  %v810 = vadd.f32 %v748, %v809
  %811 = vmatmul.bf16.gmra.mxu0 %v727
  %v812 = vpop.f32.mrf.mxu0
  %v813 = vadd.f32 %v748, %v812
  %v814 = vpop.f32.mrf.mxu0
  %v815 = vadd.f32 %v748, %v814
  %816 = vmatmul.bf16.gmra.mxu0 %v728
  %v817 = vpop.f32.mrf.mxu0
  %v818 = vadd.f32 %v748, %v817
  %v819 = vpop.f32.mrf.mxu0
  %v820 = vadd.f32 %v748, %v819
  %821 = vmatmul.bf16.gmra.mxu0 %v729
  %v822 = vpop.f32.mrf.mxu0
  %v823 = vadd.f32 %v748, %v822
  %v824 = vpop.f32.mrf.mxu0
  %v825 = vadd.f32 %v748, %v824
  %826 = vdwg.mxu0
  %827 = vst [vmem:[%s7] sm:$0xff] %v808
  %828 = vst [vmem:[%s7 + $0x8] sm:$0xff] %v810
  %829 = vst [vmem:[%s7 + $0x10] sm:$0xff] %v813
  %830 = vst [vmem:[%s7 + $0x18] sm:$0xff] %v815
  %831 = vst [vmem:[%s7 + $0x20] sm:$0xff] %v818
  %832 = vst [vmem:[%s7 + $0x28] sm:$0xff] %v820
  %833 = vst [vmem:[%s7 + $0x30] sm:$0xff] %v823
  %834 = vst [vmem:[%s7 + $0x38] sm:$0xff] %v825
  // Predicated region
  $region30: #{segformer_mix_ffn.1} parent=0 // pred_check
    _
  $region31: #{segformer_mix_ffn.1} parent=0 // pred_check_branch
    %836 = sbr.rel (0) target = $region33
  $region32: #{segformer_mix_ffn.1} parent=0 // pred_region
    _
  $region33: #{segformer_mix_ffn.1} parent=0 // pred_fallthru
    _
  // Predicated region
  $region34: #{segformer_mix_ffn.1} parent=0 // pred_check
    _
  $region35: #{segformer_mix_ffn.1} parent=0 // pred_check_branch
    %838 = sbr.rel (0) target = $region37
  $region36: #{segformer_mix_ffn.1} parent=0 // pred_region
    _
  $region37: #{segformer_mix_ffn.1} parent=0 // pred_fallthru
    _

</llo_original>
